<compile_context>
chip_gen: v7x
topology: tpu7x:2x2x1
jax: 0.10.0
libtpu: 0.0.40
codegen_flags: <defaults>
</compile_context>

<pallas_src>
import functools

import jax
import jax.numpy as jnp
from jax.experimental import pallas as pl
from jax.experimental.pallas import tpu as pltpu


FEAT_SELECT_IDX_WEIGHTED_SUM_MODE = "weighted_sum"


def _round_up(x: int, m: int) -> int:
    return ((x + m - 1) // m) * m


# ----------------------------------------------------------------------------
# WeightedSumLayer kernel (S3prlSpeechEncoderPlus, feat_select_idx='weighted_sum')
# ----------------------------------------------------------------------------
def _weighted_sum_kernel(w_ref, *refs):
    # w_ref : (L,) SMEM f32 softmax-normalized layer weights
    # refs  : L input refs of shape (blkM, D) + the (blkM, D) output ref
    o_ref = refs[-1]
    x_refs = refs[:-1]
    acc = x_refs[0][...].astype(jnp.float32) * w_ref[0]
    for l in range(1, len(x_refs)):
        acc = acc + x_refs[l][...].astype(jnp.float32) * w_ref[l]
    o_ref[...] = acc.astype(o_ref.dtype)


def weighted_sum_layer(hidden_states, weights, normalize_features=False,
                       vmem_budget_bytes=24 * 2 ** 20):
    """hidden_states: list of L arrays [B, T, D]; weights: raw learnable (L,)."""
    L = len(hidden_states)
    assert weights.shape[0] == L, (weights.shape, L)
    B, T, D = hidden_states[0].shape
    M = B * T
    out_dtype = hidden_states[0].dtype

    # Softmax over the L scalar layer-weights stays in plain JAX (L ~ a dozen).
    p = jax.nn.softmax(jnp.asarray(weights, jnp.float32))

    xs = [h.reshape(M, D) for h in hidden_states]          # free reshape, no copy
    if normalize_features:
        # TODO(synk): optional layer_norm (normalize_features=True) kept in JAX.
        xs = [(x - jnp.mean(x, -1, keepdims=True))
              * jax.lax.rsqrt(jnp.var(x, -1, keepdims=True) + 1e-5) for x in xs]

    # VMEM-budgeted row tile: 2 (double buffers) * L inputs + 2 * output per row.
    itemsize = jnp.dtype(out_dtype).itemsize
    per_row = (2 * L + 2) * D * itemsize
    blkM = max(8, min(1024, vmem_budget_bytes // max(per_row, 1)))
    blkM = (blkM // 8) * 8
    if blkM >= M:
        # Give megacore (v7x: 2 TCs) at least two grid steps when M allows.
        blkM = M if M <= 8 else max(8, _round_up((M + 1) // 2, 8))
    grid = (pl.cdiv(M, blkM),)

    vmem_limit = int(min(64 * 2 ** 20, max(32 * 2 ** 20, 2 * per_row * blkM)))

    blk_spec = pl.BlockSpec((blkM, D), lambda i: (i, 0))
    out = pl.pallas_call(
        _weighted_sum_kernel,
        out_shape=jax.ShapeDtypeStruct((M, D), out_dtype),
        grid=grid,
        in_specs=[pl.BlockSpec(memory_space=pltpu.MemorySpace.SMEM)]  # weights (L,)
                 + [blk_spec] * L,                                    # L hidden states
        out_specs=blk_spec,
        compiler_params=pltpu.CompilerParams(
            dimension_semantics=("parallel",),
            vmem_limit_bytes=vmem_limit),
    )(p, *xs)
    return out.reshape(B, T, D)


def s3prl_speech_encoder_plus_forward(hidden_states, wav_len, ws_weights,
                                      downsample_rate=160,
                                      feat_select_idx=FEAT_SELECT_IDX_WEIGHTED_SUM_MODE):
    """Port of S3prlSpeechEncoderPlus.forward (feature-selection part).

    `hidden_states` stands in for feat['hidden_states'] produced by the
    upstream encoder.
    """
    # TODO(synk): the upstream S3PRL/HuBERT encoder (self.encoder(wav)) is an
    # external pretrained network and is not re-implemented as a Pallas kernel.
    max_t = hidden_states[0].shape[1]
    wav_len_f = jnp.asarray(wav_len, jnp.float32)
    feat_len = jnp.minimum(
        jnp.round(wav_len_f / downsample_rate).astype(jnp.int32), max_t)

    if feat_select_idx == FEAT_SELECT_IDX_WEIGHTED_SUM_MODE:
        return weighted_sum_layer(hidden_states, ws_weights), feat_len
    if feat_select_idx == "hidden_states":
        return hidden_states, feat_len
    if feat_select_idx == "last_hidden_state":
        return hidden_states[-1], feat_len
    if isinstance(feat_select_idx, (list, tuple)):
        return [hidden_states[i] for i in feat_select_idx], feat_len
    raise KeyError(feat_select_idx)


# ----------------------------------------------------------------------------
# SupCon loss kernel
# ----------------------------------------------------------------------------
def _supcon_kernel(invt_ref, f_ref, gr_ref, gc_ref, loss_ref, *,
                   n_valid, inv_base_temperature):
    # invt_ref: (1,1) SMEM f32 = 1 / temperature
    # f_ref   : (Np, Dpad) resident contrast slab (bf16 on the wire)
    # gr_ref  : (TM, 1) int32 group ids of the anchor rows of this block
    # gc_ref  : (1, Np) int32 group ids of all contrast columns
    # loss_ref: (TM, 1) f32 per-anchor losses
    i = pl.program_id(0)
    tm = loss_ref.shape[0]
    n = f_ref.shape[0]

    # Anchor rows sliced straight out of the resident slab (no duplicate DMA).
    start = pl.multiple_of(i * tm, tm)
    a = f_ref[pl.ds(start, tm), :]                               # (TM, Dp) bf16

    # bf16 x bf16 -> f32 on the MXU; contract on dim 1 of both (A @ C^T).
    s = jax.lax.dot_general(
        a, f_ref[...],
        dimension_numbers=(((1,), (1,)), ((), ())),
        preferred_element_type=jnp.float32)                      # (TM, N) f32
    s = s * invt_ref[0, 0]                                       # fold 1/temperature

    # Row-max stabilization over ALL columns (matches the reference; the max
    # cancels analytically in mean_pos(logits) - log_denom).
    logits = s - jnp.max(s, axis=1, keepdims=True)

    # Masks from narrow iotas / group-id vectors; `==` broadcasts to (TM, N).
    row_ids = i * tm + jax.lax.broadcasted_iota(jnp.int32, (tm, 1), 0)
    col_ids = jax.lax.broadcasted_iota(jnp.int32, (1, n), 1)
    is_diag = row_ids == col_ids                                 # (TM, N) bool
    same_grp = gr_ref[...] == gc_ref[...]                        # (TM, N) bool
    pos_mask = same_grp & jnp.logical_not(is_diag)

    dead = is_diag
    if n_valid < n:                                              # padded columns
        dead = dead | (col_ids >= n_valid)

    e = jnp.where(dead, 0.0, jnp.exp(logits))
    log_denom = jnp.log(jnp.sum(e, axis=1, keepdims=True))       # (TM, 1)

    pos_cnt = jnp.sum(jnp.where(pos_mask, 1.0, 0.0),
                      axis=1, keepdims=True)                     # (TM, 1)
    pos_sum = jnp.sum(jnp.where(pos_mask, logits, 0.0),
                      axis=1, keepdims=True)                     # (TM, 1)

    # Zero-positive anchors are guarded (PyTorch reference would produce NaN).
    mean_log_prob_pos = pos_sum / jnp.maximum(pos_cnt, 1.0) - log_denom
    loss_ref[...] = (-inv_base_temperature) * mean_log_prob_pos


def supcon_loss(features, temperature, labels=None, mask=None,
                base_temperature=0.07, contrast_mode="all",
                compute_dtype=jnp.bfloat16, tile_cap=256):
    """features: [B, V, D] (or [B, V, ...]). Returns the scalar SupCon loss."""
    if features.ndim < 3:
        raise ValueError("`features` needs to be [bsz, n_views, ...]")
    if features.ndim > 3:
        features = features.reshape(features.shape[0], features.shape[1], -1)
    if contrast_mode != "all":
        raise ValueError("only contrast_mode='all' implemented")  # TODO(synk): 'one'
    if labels is not None and mask is not None:
        raise ValueError("Cannot define both `labels` and `mask`")
    if mask is not None:
        # TODO(synk): dense `mask` path not ported to the group-id fast path.
        raise NotImplementedError("pass `labels` (or neither) instead of a dense mask")

    B, V, D = features.shape
    N = V * B

    if labels is None:
        gid = jnp.arange(B, dtype=jnp.int32)
    else:
        gid = jnp.asarray(labels).reshape(-1).astype(jnp.int32)
        if gid.shape[0] != B:
            raise ValueError("Num of labels does not match num of features")
    gid_n = jnp.tile(gid, V)                        # view-major == contrast row order

    # contrast_feature = cat(unbind(features, dim=1), dim=0) -> [N, D]
    cf = jnp.transpose(features, (1, 0, 2)).reshape(N, D)
    # bf16 on the MXU wire: halves slab DMA/VMEM, uses the native bf16 MXU path
    # (f32 accumulation via preferred_element_type in-kernel).
    cf = cf.astype(compute_dtype)

    Dp = _round_up(D, 128)
    if Dp != D:
        cf = jnp.pad(cf, ((0, 0), (0, Dp - D)))

    # Row tile: multiple of 16 (bf16 sublane packing) so dynamic slab slices
    # stay aligned; capped for VMEM; >=2 grid blocks when N allows (v7x 2 TCs).
    unit = 16 if jnp.dtype(compute_dtype).itemsize < 4 else 8
    TM = min(tile_cap, _round_up(N, unit))
    if N > unit and _round_up(N, unit) // TM < 2:
        TM = max(unit, _round_up((N + 1) // 2, unit))
    Np = _round_up(N, TM)
    G = Np // TM

    if Np != N:
        cf = jnp.pad(cf, ((0, Np - N), (0, 0)))
        gid_n = jnp.pad(gid_n, (0, Np - N),
                        constant_values=jnp.iinfo(jnp.int32).min)  # sentinel group

    gid_rows = gid_n.reshape(Np, 1)
    gid_cols = gid_n.reshape(1, Np)

    inv_temp = (1.0 / jnp.asarray(temperature, jnp.float32)).reshape(1, 1)

    # Explicit VMEM limit so it fits v5e's ~16 MiB scoped default and v7x's
    # 64 MiB physical VMEM (slab double-buffer + [TM, Np] temporaries).
    itemsize = jnp.dtype(compute_dtype).itemsize
    est = 2 * Np * Dp * itemsize + 10 * TM * Np * 4 + 4 * Np * 4
    vmem_limit = int(min(64 * 2 ** 20, max(32 * 2 ** 20, 3 * est // 2)))

    kernel = functools.partial(
        _supcon_kernel, n_valid=N,
        inv_base_temperature=1.0 / float(base_temperature))

    per_anchor = pl.pallas_call(
        kernel,
        out_shape=jax.ShapeDtypeStruct((Np, 1), jnp.float32),
        grid=(G,),
        in_specs=[
            pl.BlockSpec(memory_space=pltpu.MemorySpace.SMEM),   # 1/temperature (1,1)
            pl.BlockSpec((Np, Dp), lambda i: (0, 0)),            # resident contrast slab
            pl.BlockSpec((TM, 1), lambda i: (i, 0)),             # anchor group ids
            pl.BlockSpec((1, Np), lambda i: (0, 0)),             # contrast group ids
        ],
        out_specs=pl.BlockSpec((TM, 1), lambda i: (i, 0)),
        compiler_params=pltpu.CompilerParams(
            dimension_semantics=("parallel",),
            vmem_limit_bytes=vmem_limit),
    )(inv_temp, cf, gid_rows, gid_cols)

    return jnp.mean(per_anchor[:N])


# ----------------------------------------------------------------------------
# pure-JAX references
# ----------------------------------------------------------------------------
def _reference_weighted_sum(hidden_states, weights):
    p = jax.nn.softmax(weights.astype(jnp.float32))
    x = jnp.stack(hidden_states, axis=0)
    return (p.reshape(-1, 1, 1, 1) * x).sum(0).astype(x.dtype)


def _reference_supcon(features, temperature, labels=None, base_temperature=0.07,
                      matmul_dtype=jnp.float32):
    B, V, D = features.shape
    if labels is None:
        base_mask = jnp.eye(B, dtype=jnp.float32)
    else:
        l = labels.reshape(-1, 1)
        base_mask = (l == l.T).astype(jnp.float32)
    cf = jnp.transpose(features, (1, 0, 2)).reshape(V * B, D)
    cf = cf.astype(matmul_dtype).astype(jnp.float32)
    adc = (cf @ cf.T) / temperature
    logits = adc - jnp.max(adc, axis=1, keepdims=True)
    N = V * B
    m = jnp.tile(base_mask, (V, V))
    lm = 1.0 - jnp.eye(N, dtype=jnp.float32)
    m = m * lm
    exp_l = jnp.exp(logits) * lm
    log_prob = logits - jnp.log(exp_l.sum(1, keepdims=True))
    mlpp = (m * log_prob).sum(1) / m.sum(1)
    loss = -(1.0 / base_temperature) * mlpp
    return loss.mean()


# ----------------------------------------------------------------------------
if __name__ == "__main__":
    key = jax.random.PRNGKey(0)
    k1, k2, k3, k4 = jax.random.split(key, 4)

    # --- S3prlSpeechEncoderPlus.forward with feat_select_idx='weighted_sum' ---
    L, B, T, D = 4, 2, 8, 32
    hidden_states = [
        jax.random.normal(jax.random.fold_in(k3, l), (B, T, D), jnp.float32)
        for l in range(L)
    ]
    ws_weights = 0.5 * jax.random.normal(k4, (L,), dtype=jnp.float32)
    wav_len = [1280, 960]

    feats, feat_len = s3prl_speech_encoder_plus_forward(
        hidden_states, wav_len, ws_weights, downsample_rate=160)
    feats = jax.block_until_ready(feats)
    ws_ref = _reference_weighted_sum(hidden_states, ws_weights)
    assert feats.shape == (B, T, D)
    assert jnp.allclose(feats, ws_ref, rtol=1e-4, atol=1e-5), \
        float(jnp.max(jnp.abs(feats - ws_ref)))
    assert feat_len.tolist() == [8, 6]

    # --- SupCon loss (labels=None / SimCLR-style positives) ---
    Bs, V, Ds = 8, 2, 32
    features = jax.random.normal(k1, (Bs, V, Ds), dtype=jnp.float32)
    features = features / jnp.linalg.norm(features, axis=-1, keepdims=True)
    temperature = jnp.float32(0.07)

    loss = jax.block_until_ready(supcon_loss(features, temperature))
    ref = _reference_supcon(features, temperature, matmul_dtype=jnp.bfloat16)
    assert jnp.allclose(loss, ref, rtol=1e-3, atol=1e-3), (float(loss), float(ref))

    # --- SupCon loss (labels path; positive mask synthesized from group ids) ---
    labels = jax.random.randint(k2, (Bs,), 0, 3)
    loss_l = jax.block_until_ready(
        supcon_loss(features, temperature, labels=labels))
    ref_l = _reference_supcon(features, temperature, labels=labels,
                              matmul_dtype=jnp.bfloat16)
    assert jnp.allclose(loss_l, ref_l, rtol=1e-3, atol=1e-3), \
        (float(loss_l), float(ref_l))

    print("KERNEL_OK")
</pallas_src>

<mosaic_0001>
module attributes {stable_mosaic.version = 11 : i64} {
  func.func @_weighted_sum_kernel(%arg0: i32, %arg1: memref<4xf32, #tpu.memory_space<smem>>, %arg2: memref<8x32xf32, #tpu.memory_space<vmem>>, %arg3: memref<8x32xf32, #tpu.memory_space<vmem>>, %arg4: memref<8x32xf32, #tpu.memory_space<vmem>>, %arg5: memref<8x32xf32, #tpu.memory_space<vmem>>, %arg6: memref<8x32xf32, #tpu.memory_space<vmem>>) attributes {dimension_semantics = [#tpu.dimension_semantics<parallel>], iteration_bounds = array<i64: 2>, scalar_prefetch = 0 : i64, scratch_operands = 0 : i64, tpu.core_type = #tpu.core_type<tc>, window_params = [{transform_indices = @transform_0, window_bounds = array<i64: 4>}, {transform_indices = @transform_1, window_bounds = array<i64: 8, 32>}, {transform_indices = @transform_2, window_bounds = array<i64: 8, 32>}, {transform_indices = @transform_3, window_bounds = array<i64: 8, 32>}, {transform_indices = @transform_4, window_bounds = array<i64: 8, 32>}, {transform_indices = @transform_5, window_bounds = array<i64: 8, 32>}]} {
    %c0 = arith.constant 0 : index
    %c0_0 = arith.constant 0 : index
    %0 = vector.load %arg2[%c0, %c0_0] : memref<8x32xf32, #tpu.memory_space<vmem>>, vector<8x32xf32>
    %c0_1 = arith.constant 0 : index
    %1 = memref.load %arg1[%c0_1] : memref<4xf32, #tpu.memory_space<smem>>
    %2 = vector.broadcast %1 : f32 to vector<8x32xf32>
    %3 = arith.mulf %0, %2 : vector<8x32xf32>
    %c0_2 = arith.constant 0 : index
    %c0_3 = arith.constant 0 : index
    %4 = vector.load %arg3[%c0_2, %c0_3] : memref<8x32xf32, #tpu.memory_space<vmem>>, vector<8x32xf32>
    %c1 = arith.constant 1 : index
    %5 = memref.load %arg1[%c1] : memref<4xf32, #tpu.memory_space<smem>>
    %6 = vector.broadcast %5 : f32 to vector<8x32xf32>
    %7 = arith.mulf %4, %6 : vector<8x32xf32>
    %8 = arith.addf %3, %7 : vector<8x32xf32>
    %c0_4 = arith.constant 0 : index
    %c0_5 = arith.constant 0 : index
    %9 = vector.load %arg4[%c0_4, %c0_5] : memref<8x32xf32, #tpu.memory_space<vmem>>, vector<8x32xf32>
    %c2 = arith.constant 2 : index
    %10 = memref.load %arg1[%c2] : memref<4xf32, #tpu.memory_space<smem>>
    %11 = vector.broadcast %10 : f32 to vector<8x32xf32>
    %12 = arith.mulf %9, %11 : vector<8x32xf32>
    %13 = arith.addf %8, %12 : vector<8x32xf32>
    %c0_6 = arith.constant 0 : index
    %c0_7 = arith.constant 0 : index
    %14 = vector.load %arg5[%c0_6, %c0_7] : memref<8x32xf32, #tpu.memory_space<vmem>>, vector<8x32xf32>
    %c3 = arith.constant 3 : index
    %15 = memref.load %arg1[%c3] : memref<4xf32, #tpu.memory_space<smem>>
    %16 = vector.broadcast %15 : f32 to vector<8x32xf32>
    %17 = arith.mulf %14, %16 : vector<8x32xf32>
    %18 = arith.addf %13, %17 : vector<8x32xf32>
    %c0_8 = arith.constant 0 : index
    %c0_9 = arith.constant 0 : index
    %19 = vector.load %arg6[%c0_8, %c0_9] : memref<8x32xf32, #tpu.memory_space<vmem>>, vector<8x32xf32>
    tpu.vector_store %arg6[%c0_8, %c0_9], %18 {strides = array<i32>} : memref<8x32xf32, #tpu.memory_space<vmem>>, vector<8x32xf32>,
    return
  }
  func.func @transform_0(%arg0: i32) -> i32 {
    %c0_i32 = arith.constant 0 : i32
    %c0_i32_0 = arith.constant 0 : i32
    return %c0_i32 : i32
  }
  func.func @transform_1(%arg0: i32) -> (i32, i32) {
    %c0_i32 = arith.constant 0 : i32
    %c0_i32_0 = arith.constant 0 : i32
    return %arg0, %c0_i32 : i32, i32
  }
  func.func @transform_2(%arg0: i32) -> (i32, i32) {
    %c0_i32 = arith.constant 0 : i32
    %c0_i32_0 = arith.constant 0 : i32
    return %arg0, %c0_i32 : i32, i32
  }
  func.func @transform_3(%arg0: i32) -> (i32, i32) {
    %c0_i32 = arith.constant 0 : i32
    %c0_i32_0 = arith.constant 0 : i32
    return %arg0, %c0_i32 : i32, i32
  }
  func.func @transform_4(%arg0: i32) -> (i32, i32) {
    %c0_i32 = arith.constant 0 : i32
    %c0_i32_0 = arith.constant 0 : i32
    return %arg0, %c0_i32 : i32, i32
  }
  func.func @transform_5(%arg0: i32) -> (i32, i32) {
    %c0_i32 = arith.constant 0 : i32
    %c0_i32_0 = arith.constant 0 : i32
    return %arg0, %c0_i32 : i32, i32
  }
}

</mosaic_0001>

<llo_original>
// kernel: tpu_custom_call.1
$region0: #{tpu_custom_call.1}
  #allocation0 [shape = 'u32[]', space=smem, size = 0x4, offset = 0x4, fixed_abs, tag = 'smem constant byte address 0x4 - core index']
  #allocation1 [shape = 'u32[144,128]{1,0:T(1,128)}', space=vmem, size = 0x12000, scoped, tag = 'internal scratch']
  %s0 = inlined_call_operand.hbm [shape: f32[4], index: 0, kind: input, shape index: {}]
  %s1 = inlined_call_operand.hbm [shape: f32[16,32], index: 1, kind: input, shape index: {}]
  %s2 = inlined_call_operand.hbm [shape: f32[16,32], index: 2, kind: input, shape index: {}]
  %s3 = inlined_call_operand.hbm [shape: f32[16,32], index: 3, kind: input, shape index: {}]
  %s4 = inlined_call_operand.hbm [shape: f32[16,32], index: 4, kind: input, shape index: {}]
  %s5 = inlined_call_operand.hbm [shape: f32[16,32], index: 5, kind: output, shape index: {}]
  %s6 = sld [smem:[#allocation0]]
  $region73: #{tpu_custom_call.1} parent=0
    _
  %s8 = ssub.s32 1, %s6
  %s9 = scalar_select 0, %s8, %s6
  $region1: #{tpu_custom_call.1} parent=0
    #allocation2 [shape = 'u8[512]{0}', space=smem, size = 0x200, scoped, tag = 'input window, operand 0, single buffered']
    #allocation3 [shape = 's32[2]{0}', space=sflag, size = 0x8, scoped, tag = 'scoped memory for tpu_custom_call.1']
    #allocation4 [shape = 's32[2]{0}', space=sflag, size = 0x8, scoped, tag = 'scoped memory for tpu_custom_call.1']
    #allocation5 [shape = 's32[2]{0}', space=sflag, size = 0x8, scoped, tag = 'scoped memory for tpu_custom_call.1']
    #allocation6 [shape = 'u8[8192]{0}', space=vmem, size = 0x2000, scoped, tag = 'input window, operand 1']
    #allocation7 [shape = 'u8[8192]{0}', space=vmem, size = 0x2000, scoped, tag = 'input window, operand 2']
    #allocation8 [shape = 's32[2]{0}', space=sflag, size = 0x8, scoped, tag = 'scoped memory for tpu_custom_call.1']
    #allocation9 [shape = 'u8[8192]{0}', space=vmem, size = 0x2000, scoped, tag = 'input window, operand 3']
    #allocation10 [shape = 'u8[8192]{0}', space=vmem, size = 0x2000, scoped, tag = 'input window, operand 4']
    #allocation11 [shape = 's32[2]{0}', space=sflag, size = 0x8, scoped, tag = 'scoped memory for tpu_custom_call.1']
    #allocation12 [shape = 'u8[8192]{0}', space=vmem, size = 0x2000, scoped, tag = 'output window, operand 0']
    %10 = vsyncpa [#allocation5], 0
    %11 = vsyncpa [#allocation3], 0
    %s12 = scalar_lea.sflag [#allocation3], 1
    %13 = vsyncpa %s12, 0
    %14 = vsyncpa [#allocation8], 0
    %s15 = scalar_lea.sflag [#allocation8], 1
    %16 = vsyncpa %s15, 0
    %17 = vsyncpa [#allocation11], 0
    %s18 = scalar_lea.sflag [#allocation11], 1
    %19 = vsyncpa %s18, 0
    %20 = vsyncpa [#allocation4], 0
    %s21 = scalar_lea.sflag [#allocation4], 1
    %22 = vsyncpa %s21, 0
    loop: start=0, step=1, limit=4
    $region2: #{tpu_custom_call.1} parent=1 // loop_pre_header
      _
    $region3: #{tpu_custom_call.1} parent=1 // loop_header
      %s24 = sphi 0, %s28
      %p25 = scmp.ge.s32.totalorder %s24, 4
      %s32 = sphi 0, %s32
      %s34 = sphi 0, %s32
      %s35 = sphi 0, %s34
      %s49 = sphi 0, %s35
      %s55 = sphi 0, %s57
      %s58 = sphi 0, %s55
      %s59 = sphi 0, %s58
      %s75 = sphi 0, %s59
      %s81 = sphi 0, %s83
      %s84 = sphi 0, %s81
      %s85 = sphi 0, %s84
      %s101 = sphi 0, %s85
      %s107 = sphi 0, %s109
      %s110 = sphi 0, %s107
      %s111 = sphi 0, %s110
      %s127 = sphi 0, %s111
      %s133 = sphi 0, %s135
      %s136 = sphi 0, %s133
      %s137 = sphi 0, %s136
      %s153 = sphi 0, %s137
      %s159 = sphi 0, %s161
      %s162 = sphi 0, %s159
      %s163 = sphi 0, %s162
      %s179 = sphi 0, %s163
    $region4: #{tpu_custom_call.1} parent=1 // loop_header_branch
      %27 = sbr.rel (%p25) target = $region8
    $region5: #{tpu_custom_call.1} parent=1 // loop_body
      %s29 = ssub.s32 %s24, 1
      %s30 = ssub.s32 %s24, 2
      %s31 = sadd.s32 %s24, 1
      %s33 = sadd.s32 %s32, 1
      %p36 = scmp.eq.s32.totalorder %s24, 1
      %p37 = scmp.ne.s32.totalorder %s32, %s34
      %p38 = scmp.eq.s32.totalorder %s24, 0
      %p39 = por %p37, %p38
      %p40 = scmp.ne.s32.totalorder %s32, %s34
      %p41 = scmp.eq.s32.totalorder %s29, 1
      %p42 = por %p40, %p41
      %p43 = scmp.ne.s32.totalorder %s34, %s35
      %p44 = scmp.eq.s32.totalorder %s29, 0
      %p45 = por %p43, %p44
      %p46 = scmp.ne.s32.totalorder %s34, %s35
      %p47 = scmp.eq.s32.totalorder %s30, 1
      %p48 = por %p46, %p47
      %p50 = scmp.ne.s32.totalorder %s35, %s49
      %p51 = scmp.eq.s32.totalorder %s30, 0
      %p52 = por %p50, %p51
      %s53 = ssub.s32 %s24, %s31
      %p54 = scmp.eq.s32.totalorder %s53, 0
      %s56 = sadd.s32 %s55, 1
      %s57 = scalar_select %p54, %s55, %s56
      %p60 = pneg %p54
      %p61 = scmp.eq.s32.totalorder %s24, 1
      %p62 = por %p60, %p61
      %p63 = scmp.ne.s32.totalorder %s55, %s58
      %p64 = scmp.eq.s32.totalorder %s24, 0
      %p65 = por %p63, %p64
      %p66 = scmp.ne.s32.totalorder %s55, %s58
      %p67 = scmp.eq.s32.totalorder %s29, 1
      %p68 = por %p66, %p67
      %p69 = scmp.ne.s32.totalorder %s58, %s59
      %p70 = scmp.eq.s32.totalorder %s29, 0
      %p71 = por %p69, %p70
      %p72 = scmp.ne.s32.totalorder %s58, %s59
      %p73 = scmp.eq.s32.totalorder %s30, 1
      %p74 = por %p72, %p73
      %p76 = scmp.ne.s32.totalorder %s59, %s75
      %p77 = scmp.eq.s32.totalorder %s30, 0
      %p78 = por %p76, %p77
      %s79 = ssub.s32 %s24, %s31
      %p80 = scmp.eq.s32.totalorder %s79, 0
      %s82 = sadd.s32 %s81, 1
      %s83 = scalar_select %p80, %s81, %s82
      %p86 = pneg %p80
      %p87 = scmp.eq.s32.totalorder %s24, 1
      %p88 = por %p86, %p87
      %p89 = scmp.ne.s32.totalorder %s81, %s84
      %p90 = scmp.eq.s32.totalorder %s24, 0
      %p91 = por %p89, %p90
      %p92 = scmp.ne.s32.totalorder %s81, %s84
      %p93 = scmp.eq.s32.totalorder %s29, 1
      %p94 = por %p92, %p93
      %p95 = scmp.ne.s32.totalorder %s84, %s85
      %p96 = scmp.eq.s32.totalorder %s29, 0
      %p97 = por %p95, %p96
      %p98 = scmp.ne.s32.totalorder %s84, %s85
      %p99 = scmp.eq.s32.totalorder %s30, 1
      %p100 = por %p98, %p99
      %p102 = scmp.ne.s32.totalorder %s85, %s101
      %p103 = scmp.eq.s32.totalorder %s30, 0
      %p104 = por %p102, %p103
      %s105 = ssub.s32 %s24, %s31
      %p106 = scmp.eq.s32.totalorder %s105, 0
      %s108 = sadd.s32 %s107, 1
      %s109 = scalar_select %p106, %s107, %s108
      %p112 = pneg %p106
      %p113 = scmp.eq.s32.totalorder %s24, 1
      %p114 = por %p112, %p113
      %p115 = scmp.ne.s32.totalorder %s107, %s110
      %p116 = scmp.eq.s32.totalorder %s24, 0
      %p117 = por %p115, %p116
      %p118 = scmp.ne.s32.totalorder %s107, %s110
      %p119 = scmp.eq.s32.totalorder %s29, 1
      %p120 = por %p118, %p119
      %p121 = scmp.ne.s32.totalorder %s110, %s111
      %p122 = scmp.eq.s32.totalorder %s29, 0
      %p123 = por %p121, %p122
      %p124 = scmp.ne.s32.totalorder %s110, %s111
      %p125 = scmp.eq.s32.totalorder %s30, 1
      %p126 = por %p124, %p125
      %p128 = scmp.ne.s32.totalorder %s111, %s127
      %p129 = scmp.eq.s32.totalorder %s30, 0
      %p130 = por %p128, %p129
      %s131 = ssub.s32 %s24, %s31
      %p132 = scmp.eq.s32.totalorder %s131, 0
      %s134 = sadd.s32 %s133, 1
      %s135 = scalar_select %p132, %s133, %s134
      %p138 = pneg %p132
      %p139 = scmp.eq.s32.totalorder %s24, 1
      %p140 = por %p138, %p139
      %p141 = scmp.ne.s32.totalorder %s133, %s136
      %p142 = scmp.eq.s32.totalorder %s24, 0
      %p143 = por %p141, %p142
      %p144 = scmp.ne.s32.totalorder %s133, %s136
      %p145 = scmp.eq.s32.totalorder %s29, 1
      %p146 = por %p144, %p145
      %p147 = scmp.ne.s32.totalorder %s136, %s137
      %p148 = scmp.eq.s32.totalorder %s29, 0
      %p149 = por %p147, %p148
      %p150 = scmp.ne.s32.totalorder %s136, %s137
      %p151 = scmp.eq.s32.totalorder %s30, 1
      %p152 = por %p150, %p151
      %p154 = scmp.ne.s32.totalorder %s137, %s153
      %p155 = scmp.eq.s32.totalorder %s30, 0
      %p156 = por %p154, %p155
      %s157 = ssub.s32 %s24, %s31
      %p158 = scmp.eq.s32.totalorder %s157, 0
      %s160 = sadd.s32 %s159, 1
      %s161 = scalar_select %p158, %s159, %s160
      %p164 = pneg %p158
      %p165 = scmp.eq.s32.totalorder %s24, 1
      %p166 = por %p164, %p165
      %p167 = scmp.ne.s32.totalorder %s159, %s162
      %p168 = scmp.eq.s32.totalorder %s24, 0
      %p169 = por %p167, %p168
      %p170 = scmp.ne.s32.totalorder %s159, %s162
      %p171 = scmp.eq.s32.totalorder %s29, 1
      %p172 = por %p170, %p171
      %p173 = scmp.ne.s32.totalorder %s162, %s163
      %p174 = scmp.eq.s32.totalorder %s29, 0
      %p175 = por %p173, %p174
      %p176 = scmp.ne.s32.totalorder %s162, %s163
      %p177 = scmp.eq.s32.totalorder %s30, 1
      %p178 = por %p176, %p177
      %p180 = scmp.ne.s32.totalorder %s163, %s179
      %p181 = scmp.eq.s32.totalorder %s30, 0
      %p182 = por %p180, %p181
      %p183 = scmp.le.s32.totalorder 1, %s24
      %p184 = scmp.lt.s32.totalorder %s24, 3
      %p185 = pnand %p183, %p184
      %p186 = pneg %p185
      // Predicated region
      $region9: #{tpu_custom_call.1} parent=5 // pred_check
        _
      $region10: #{tpu_custom_call.1} parent=5 // pred_check_branch
        %188 = sbr.rel (%p185) target = $region12
      $region11: #{tpu_custom_call.1} parent=5 // pred_region
        %s189 = ssub.s32 %s24, 1
        // Predicated region
        $region13: #{tpu_custom_call.1} parent=11 // pred_check
          %p190 = pneg %p45
        $region14: #{tpu_custom_call.1} parent=11 // pred_check_branch
          %192 = sbr.rel (%p190) target = $region16
        $region15: #{tpu_custom_call.1} parent=11 // pred_region
          %s194 = ssub.s32 16, 16
          %195 = vsyncadd [#allocation5], %s194
          %198 = dma.hbm_to_smem %s0, 16, [#allocation2], [#allocation5]
        $region16: #{tpu_custom_call.1} parent=11 // pred_fallthru
          _
      $region12: #{tpu_custom_call.1} parent=5 // pred_fallthru
        _
      %p199 = scmp.lt.s32.totalorder %s24, 2
      // Predicated region
      $region17: #{tpu_custom_call.1} parent=5 // pred_check
        %p200 = pneg %p199
      $region18: #{tpu_custom_call.1} parent=5 // pred_check_branch
        %202 = sbr.rel (%p200) target = $region20
      $region19: #{tpu_custom_call.1} parent=5 // pred_region
        // Predicated region
        $region21: #{tpu_custom_call.1} parent=19 // pred_check
          %p203 = pneg %p65
        $region22: #{tpu_custom_call.1} parent=19 // pred_check_branch
          %205 = sbr.rel (%p203) target = $region24
        $region23: #{tpu_custom_call.1} parent=19 // pred_region
          %s206 = sand.u32 %s55, 1
          %s207 = scalar_lea.sflag [#allocation3], %s206
          %s208 = sand.u32 %s55, 1
          %s209 = smul.addr %s208, 8
          %s210 = scalar_lea.vmem [#allocation6], %s209
          %s212 = ssub.s32 128, 128
          %213 = vsyncadd %s207, %s212
          %s214 = smul.addr %s24, 128
          %s215 = scalar_lea.hbm %s1, %s214
          %s217 = sshll.u32 %s210, 4
          %s218 = int_to_ptr.vmem [resolvable:$true] %s217
          %220 = dma.hbm_to_vmem [thread:$0]  %s215, 128, %s218, %s207
        $region24: #{tpu_custom_call.1} parent=19 // pred_fallthru
          _
        // Predicated region
        $region25: #{tpu_custom_call.1} parent=19 // pred_check
          %p221 = pneg %p91
        $region26: #{tpu_custom_call.1} parent=19 // pred_check_branch
          %223 = sbr.rel (%p221) target = $region28
        $region27: #{tpu_custom_call.1} parent=19 // pred_region
          %s224 = sand.u32 %s24, 1
          %s225 = scalar_lea.sflag [#allocation8], %s224
          %s226 = sand.u32 %s81, 1
          %s227 = smul.addr %s226, 8
          %s228 = scalar_lea.vmem [#allocation7], %s227
          %s230 = ssub.s32 128, 128
          %231 = vsyncadd %s225, %s230
          %s232 = smul.addr %s24, 128
          %s233 = scalar_lea.hbm %s2, %s232
          %s235 = sshll.u32 %s228, 4
          %s236 = int_to_ptr.vmem [resolvable:$true] %s235
          %238 = dma.hbm_to_vmem [thread:$0]  %s233, 128, %s236, %s225
        $region28: #{tpu_custom_call.1} parent=19 // pred_fallthru
          _
        // Predicated region
        $region29: #{tpu_custom_call.1} parent=19 // pred_check
          %p239 = pneg %p117
        $region30: #{tpu_custom_call.1} parent=19 // pred_check_branch
          %241 = sbr.rel (%p239) target = $region32
        $region31: #{tpu_custom_call.1} parent=19 // pred_region
          %s242 = sand.u32 %s24, 1
          %s243 = scalar_lea.sflag [#allocation8], %s242
          %s244 = sand.u32 %s107, 1
          %s245 = smul.addr %s244, 8
          %s246 = scalar_lea.vmem [#allocation9], %s245
          %s248 = ssub.s32 128, 128
          %249 = vsyncadd %s243, %s248
          %s250 = smul.addr %s24, 128
          %s251 = scalar_lea.hbm %s3, %s250
          %s253 = sshll.u32 %s246, 4
          %s254 = int_to_ptr.vmem [resolvable:$true] %s253
          %256 = dma.hbm_to_vmem [thread:$0]  %s251, 128, %s254, %s243
        $region32: #{tpu_custom_call.1} parent=19 // pred_fallthru
          _
        // Predicated region
        $region33: #{tpu_custom_call.1} parent=19 // pred_check
          %p257 = pneg %p143
        $region34: #{tpu_custom_call.1} parent=19 // pred_check_branch
          %259 = sbr.rel (%p257) target = $region36
        $region35: #{tpu_custom_call.1} parent=19 // pred_region
          %s260 = sand.u32 %s133, 1
          %s261 = scalar_lea.sflag [#allocation11], %s260
          %s262 = sand.u32 %s133, 1
          %s263 = smul.addr %s262, 8
          %s264 = scalar_lea.vmem [#allocation10], %s263
          %s266 = ssub.s32 128, 128
          %267 = vsyncadd %s261, %s266
          %s268 = smul.addr %s24, 128
          %s269 = scalar_lea.hbm %s4, %s268
          %s271 = sshll.u32 %s264, 4
          %s272 = int_to_ptr.vmem [resolvable:$true] %s271
          %274 = dma.hbm_to_vmem [thread:$0]  %s269, 128, %s272, %s261
        $region36: #{tpu_custom_call.1} parent=19 // pred_fallthru
          _
      $region20: #{tpu_custom_call.1} parent=5 // pred_fallthru
        _
      %p275 = scmp.le.s32.totalorder 1, %s24
      %p276 = scmp.lt.s32.totalorder %s24, 3
      %p277 = pnand %p275, %p276
      %p278 = pneg %p277
      // Predicated region
      $region37: #{tpu_custom_call.1} parent=5 // pred_check
        _
      $region38: #{tpu_custom_call.1} parent=5 // pred_check_branch
        %280 = sbr.rel (%p277) target = $region40
      $region39: #{tpu_custom_call.1} parent=5 // pred_region
        %s281 = ssub.s32 %s24, 1
        // Predicated region
        $region41: #{tpu_custom_call.1} parent=39 // pred_check
          %p282 = pneg %p45
        $region42: #{tpu_custom_call.1} parent=39 // pred_check_branch
          %284 = sbr.rel (%p282) target = $region44
        $region43: #{tpu_custom_call.1} parent=39 // pred_region
          %285 = dma.done [#allocation5], 16
        $region44: #{tpu_custom_call.1} parent=39 // pred_fallthru
          _
        %s286 = sand.u32 %s58, 1
        %s287 = scalar_lea.sflag [#allocation3], %s286
        %s288 = sand.u32 %s58, 1
        %s289 = smul.addr %s288, 8
        %s290 = scalar_lea.vmem [#allocation6], %s289
        // Predicated region
        $region45: #{tpu_custom_call.1} parent=39 // pred_check
          %p291 = pneg %p71
        $region46: #{tpu_custom_call.1} parent=39 // pred_check_branch
          %293 = sbr.rel (%p291) target = $region48
        $region47: #{tpu_custom_call.1} parent=39 // pred_region
          %294 = dma.done %s287, 128
        $region48: #{tpu_custom_call.1} parent=39 // pred_fallthru
          _
        %s295 = sand.u32 %s29, 1
        %s296 = scalar_lea.sflag [#allocation8], %s295
        %s297 = sand.u32 %s84, 1
        %s298 = smul.addr %s297, 8
        %s299 = scalar_lea.vmem [#allocation7], %s298
        // Predicated region
        $region49: #{tpu_custom_call.1} parent=39 // pred_check
          %p300 = pneg %p97
        $region50: #{tpu_custom_call.1} parent=39 // pred_check_branch
          %302 = sbr.rel (%p300) target = $region52
        $region51: #{tpu_custom_call.1} parent=39 // pred_region
          %303 = dma.done %s296, 128
        $region52: #{tpu_custom_call.1} parent=39 // pred_fallthru
          _
        %s304 = sand.u32 %s29, 1
        %s305 = scalar_lea.sflag [#allocation8], %s304
        %s306 = sand.u32 %s110, 1
        %s307 = smul.addr %s306, 8
        %s308 = scalar_lea.vmem [#allocation9], %s307
        // Predicated region
        $region53: #{tpu_custom_call.1} parent=39 // pred_check
          %p309 = pneg %p123
        $region54: #{tpu_custom_call.1} parent=39 // pred_check_branch
          %311 = sbr.rel (%p309) target = $region56
        $region55: #{tpu_custom_call.1} parent=39 // pred_region
          %312 = dma.done %s305, 128
        $region56: #{tpu_custom_call.1} parent=39 // pred_fallthru
          _
        %s313 = sand.u32 %s136, 1
        %s314 = scalar_lea.sflag [#allocation11], %s313
        %s315 = sand.u32 %s136, 1
        %s316 = smul.addr %s315, 8
        %s317 = scalar_lea.vmem [#allocation10], %s316
        // Predicated region
        $region57: #{tpu_custom_call.1} parent=39 // pred_check
          %p318 = pneg %p149
        $region58: #{tpu_custom_call.1} parent=39 // pred_check_branch
          %320 = sbr.rel (%p318) target = $region60
        $region59: #{tpu_custom_call.1} parent=39 // pred_region
          %321 = dma.done %s314, 128
        $region60: #{tpu_custom_call.1} parent=39 // pred_fallthru
          _
        %322 = sfence
        %p323 = pneg %p45
        %p324 = pneg %p42
        %s325 = sand.u32 %s58, 1
        %s326 = scalar_lea.sflag [#allocation3], %s325
        %s327 = sand.u32 %s58, 1
        %s328 = smul.addr %s327, 8
        %s329 = scalar_lea.vmem [#allocation6], %s328
        %p330 = pneg %p71
        %p331 = pneg %p68
        %s332 = sand.u32 %s29, 1
        %s333 = scalar_lea.sflag [#allocation8], %s332
        %s334 = sand.u32 %s84, 1
        %s335 = smul.addr %s334, 8
        %s336 = scalar_lea.vmem [#allocation7], %s335
        %p337 = pneg %p97
        %p338 = pneg %p94
        %s339 = sand.u32 %s29, 1
        %s340 = scalar_lea.sflag [#allocation8], %s339
        %s341 = sand.u32 %s110, 1
        %s342 = smul.addr %s341, 8
        %s343 = scalar_lea.vmem [#allocation9], %s342
        %p344 = pneg %p123
        %p345 = pneg %p120
        %s346 = sand.u32 %s136, 1
        %s347 = scalar_lea.sflag [#allocation11], %s346
        %s348 = sand.u32 %s136, 1
        %s349 = smul.addr %s348, 8
        %s350 = scalar_lea.vmem [#allocation10], %s349
        %p351 = pneg %p149
        %p352 = pneg %p146
        %p353 = pneg %p175
        %p354 = pneg %p172
        %s355 = sand.u32 %s162, 1
        %s356 = scalar_lea.sflag [#allocation4], %s355
        %s357 = sand.u32 %s162, 1
        %s358 = smul.addr %s357, 8
        %s359 = scalar_lea.vmem [#allocation12], %s358
        %v360 = vld [vmem:[%s290] sm:$0xff]
        %s361 = sld [smem:[#allocation2]]
        %v362 = vstv %s361
        %v363 = vmul.f32 %v360, %v362
        %v364 = vld [vmem:[%s299] sm:$0xff]
        %s365 = sld [smem:[#allocation2 + $0x1]]
        %v366 = vstv %s365
        %v367 = vmul.f32 %v364, %v366
        %v368 = vadd.f32 %v363, %v367
        %v369 = vld [vmem:[%s308] sm:$0xff]
        %s370 = sld [smem:[#allocation2 + $0x2]]
        %v371 = vstv %s370
        %v372 = vmul.f32 %v369, %v371
        %v373 = vadd.f32 %v368, %v372
        %v374 = vld [vmem:[%s317] sm:$0xff]
        %s375 = sld [smem:[#allocation2 + $0x3]]
        %v376 = vstv %s375
        %v377 = vmul.f32 %v374, %v376
        %v378 = vadd.f32 %v373, %v377
        %vm379 = vcmask 261120
        %380 = vst.msk [vmem:[%s359] sm:$0xff] %vm379, %v378
        %s381 = sand.u32 %s162, 1
        %s382 = scalar_lea.sflag [#allocation4], %s381
        %s383 = sand.u32 %s162, 1
        %s384 = smul.addr %s383, 8
        %s385 = scalar_lea.vmem [#allocation12], %s384
        // Predicated region
        $region61: #{tpu_custom_call.1} parent=39 // pred_check
          %p386 = pneg %p172
        $region62: #{tpu_custom_call.1} parent=39 // pred_check_branch
          %388 = sbr.rel (%p386) target = $region64
        $region63: #{tpu_custom_call.1} parent=39 // pred_region
          %s390 = ssub.s32 128, 128
          %391 = vsyncadd %s382, %s390
          %s392 = smul.addr %s29, 128
          %s393 = scalar_lea.hbm %s5, %s392
          %s395 = sshll.u32 %s385, 4
          %s396 = int_to_ptr.vmem [resolvable:$true] %s395
          %398 = dma.vmem_to_hbm [thread:$0]  %s396, 128, %s393, %s382
        $region64: #{tpu_custom_call.1} parent=39 // pred_fallthru
          _
      $region40: #{tpu_custom_call.1} parent=5 // pred_fallthru
        _
      %p399 = scmp.le.s32.totalorder 2, %s24
      // Predicated region
      $region65: #{tpu_custom_call.1} parent=5 // pred_check
        %p400 = pneg %p399
      $region66: #{tpu_custom_call.1} parent=5 // pred_check_branch
        %402 = sbr.rel (%p400) target = $region68
      $region67: #{tpu_custom_call.1} parent=5 // pred_region
        %s403 = ssub.s32 %s24, 2
        // Predicated region
        $region69: #{tpu_custom_call.1} parent=67 // pred_check
          %p404 = pneg %p178
        $region70: #{tpu_custom_call.1} parent=67 // pred_check_branch
          %406 = sbr.rel (%p404) target = $region72
        $region71: #{tpu_custom_call.1} parent=67 // pred_region
          %s407 = sand.u32 %s163, 1
          %s408 = scalar_lea.sflag [#allocation4], %s407
          %s409 = sand.u32 %s163, 1
          %s410 = smul.addr %s409, 8
          %s411 = scalar_lea.vmem [#allocation12], %s410
          %412 = dma.done %s408, 128
        $region72: #{tpu_custom_call.1} parent=67 // pred_fallthru
          _
      $region68: #{tpu_custom_call.1} parent=5 // pred_fallthru
        _
    $region6: #{tpu_custom_call.1} parent=1 // loop_footer
      %s28 = sadd.s32 1, %s24
    $region7: #{tpu_custom_call.1} parent=1 // loop_footer_branch
      %23 = sbr.rel target = $region3
    $region8: #{tpu_custom_call.1} parent=1 // loop_exit
      _
    %413 = vsyncpa [#allocation3], 1
    %s414 = scalar_lea.sflag [#allocation3], 1
    %415 = vsyncpa %s414, 1
    %416 = vsyncpa [#allocation8], 1
    %s417 = scalar_lea.sflag [#allocation8], 1
    %418 = vsyncpa %s417, 1
    %419 = vsyncpa [#allocation11], 1
    %s420 = scalar_lea.sflag [#allocation11], 1
    %421 = vsyncpa %s420, 1
    %422 = vsyncpa [#allocation4], 1
    %s423 = scalar_lea.sflag [#allocation4], 1
    %424 = vsyncpa %s423, 1
    %425 = vsyncpa [#allocation5], 1
    %s426 = scalar_lea.sflag [#allocation5], 1
    %427 = vsyncpa %s426, 1

</llo_original>
